<compile_context>
chip_gen: v7x
topology: tpu7x:2x2x1
jax: 0.10.0
libtpu: 0.0.40
codegen_flags: <defaults>
</compile_context>

<pallas_src>
import functools

import jax
import jax.numpy as jnp
from jax.experimental import pallas as pl
from jax.experimental.pallas import tpu as pltpu


def _final_block2_kernel(x_ref, w_ref, gb_ref, o_ref, *, n_batch, eps):
    # x_ref:  (W, N*L) f32   activations, relaid out so the matmul RHS is lane-dense
    #                        (column j = n*L + l, n-major)
    # w_ref:  (C, W)   f32   fc weight, native Conv1d (out, in) layout
    # gb_ref: (2, C)   f32   row 0 = BN gamma, row 1 = BN beta (BN channel == l, C == L)
    # o_ref:  (C, N*L) f32   BN'd conv output, still in matmul orientation
    c = w_ref.shape[0]
    nl = x_ref.shape[1]
    l = nl // n_batch
    inv_count = 1.0 / float(n_batch * c)

    # --- fc: 1x1 Conv1d (no bias) — one lane-dense MXU matmul for all batches ----
    #   y[c, n*L + l] = sum_w W_fc[c, w] * x[n, w, l]
    y = jnp.dot(w_ref[...], x_ref[...], preferred_element_type=jnp.float32)  # (C, N*L)

    # --- BatchNorm1d(num_classes) stats: per-l over (n, c), biased variance -------
    # One pass over y: sublane-reduce over c, then fold the n column groups with
    # static lane slices (no per-batch intermediates kept live).
    col_sum = jnp.sum(y, axis=0, keepdims=True)        # (1, N*L)
    col_sqs = jnp.sum(y * y, axis=0, keepdims=True)    # (1, N*L)
    sum_l = col_sum[:, 0:l]
    sqs_l = col_sqs[:, 0:l]
    for i in range(1, n_batch):
        sum_l = sum_l + col_sum[:, i * l:(i + 1) * l]
        sqs_l = sqs_l + col_sqs[:, i * l:(i + 1) * l]
    mean = sum_l * inv_count                                        # (1, L)
    var = jnp.maximum(sqs_l * inv_count - mean * mean, 0.0)         # (1, L)
    inv_std = jax.lax.rsqrt(var + eps)                              # (1, L)

    # Fold normalize + affine into one per-l scale/shift.
    gamma = gb_ref[0:1, :]                                          # (1, C) == (1, L)
    beta = gb_ref[1:2, :]                                           # (1, C)
    scale = inv_std * gamma                                         # (1, L)
    shift = beta - mean * scale                                     # (1, L)

    # --- apply: one fused pass over y; output stays in (C, N*L) orientation -------
    # (permute(0, 2, 1) is deferred to the consumer / wrapper, per perf review)
    for i in range(n_batch):
        sl = slice(i * l, (i + 1) * l)
        o_ref[:, sl] = y[:, sl] * scale + shift


def final_block2(x_ncl, w_fc, gamma, beta, eps=1e-5):
    """x_ncl: (N, width, L); w_fc: (num_classes, width); gamma/beta: (num_classes,)."""
    N, W, L = x_ncl.shape
    C = w_fc.shape[0]
    # permute(0,2,1) + BatchNorm1d(num_classes) only typechecks when L == C.
    assert L == C, "FinalBlock2 requires seq_len == num_classes (BN after permute)"

    # Single cheap relayout so the conv is one lane-dense matmul over all batches.
    x_flat = jnp.transpose(x_ncl, (1, 0, 2)).reshape(W, N * L).astype(jnp.float32)
    # Pack gamma/beta into one input => one fewer tiny input DMA.
    gb = jnp.stack([gamma, beta]).reshape(2, C).astype(jnp.float32)

    kernel = functools.partial(_final_block2_kernel, n_batch=N, eps=float(eps))
    vmem = pl.BlockSpec(memory_space=pltpu.MemorySpace.VMEM)
    out_cnl = pl.pallas_call(
        kernel,
        out_shape=jax.ShapeDtypeStruct((C, N * L), jnp.float32),
        in_specs=[vmem, vmem, vmem],
        out_specs=vmem,
    )(x_flat, w_fc.astype(jnp.float32), gb)

    # Deferred permute(0, 2, 1): (C, N*L) -> (N, L, C); tiny metadata-level reshape
    # plus one XLA transpose on the consumer side (module output layout preserved).
    return jnp.transpose(out_cnl.reshape(C, N, L), (1, 2, 0))


def _reference(x_ncl, w_fc, gamma, beta, eps=1e-5):
    # Pure-JAX mirror of the PyTorch forward (training-mode BN, biased variance).
    fc_out = jnp.einsum("cw,nwl->ncl", w_fc, x_ncl)          # Conv1d k=1, no bias
    y = jnp.transpose(fc_out, (0, 2, 1))                     # permute(0, 2, 1)
    mean = jnp.mean(y, axis=(0, 2), keepdims=True)
    var = jnp.mean((y - mean) ** 2, axis=(0, 2), keepdims=True)
    yhat = (y - mean) / jnp.sqrt(var + eps)
    return yhat * gamma.reshape(1, -1, 1) + beta.reshape(1, -1, 1)


if __name__ == "__main__":
    # opt.width = 32, opt.num_classes = 8, opt.affine_bn = True, opt.bn_eps = 1e-5
    # batch N = 2, seq length L = num_classes = 8 (required by the forward).
    N, WIDTH, NUM_CLASSES, L = 2, 32, 8, 8
    EPS = 1e-5

    key = jax.random.PRNGKey(0)
    k_x, k_w, k_g, k_b = jax.random.split(key, 4)
    x = jax.random.normal(k_x, (N, WIDTH, L), dtype=jnp.float32)
    w_fc = 0.1 * jax.random.normal(k_w, (NUM_CLASSES, WIDTH), dtype=jnp.float32)
    gamma = 1.0 + 0.1 * jax.random.normal(k_g, (NUM_CLASSES,), dtype=jnp.float32)
    beta = 0.05 * jax.random.normal(k_b, (NUM_CLASSES,), dtype=jnp.float32)

    out = final_block2(x, w_fc, gamma, beta, eps=EPS)
    out = jax.block_until_ready(out)

    ref = _reference(x, w_fc, gamma, beta, eps=EPS)
    assert out.shape == (N, L, NUM_CLASSES)
    err = float(jnp.max(jnp.abs(out - ref)))
    assert err < 1e-4, f"mismatch vs. reference: {err}"

    print("KERNEL_OK")
</pallas_src>

<mosaic_0001>
module attributes {stable_mosaic.version = 11 : i64} {
  func.func @_final_block2_kernel(%arg0: memref<32x16xf32, #tpu.memory_space<vmem>>, %arg1: memref<8x32xf32, #tpu.memory_space<vmem>>, %arg2: memref<2x8xf32, #tpu.memory_space<vmem>>, %arg3: memref<8x16xf32, #tpu.memory_space<vmem>>) attributes {dimension_semantics = [], scalar_prefetch = 0 : i64, scratch_operands = 0 : i64, tpu.core_type = #tpu.core_type<tc>} {
    %c0 = arith.constant 0 : index
    %c0_0 = arith.constant 0 : index
    %0 = vector.load %arg1[%c0, %c0_0] : memref<8x32xf32, #tpu.memory_space<vmem>>, vector<8x32xf32>
    %c0_1 = arith.constant 0 : index
    %c0_2 = arith.constant 0 : index
    %1 = vector.load %arg0[%c0_1, %c0_2] : memref<32x16xf32, #tpu.memory_space<vmem>>, vector<32x16xf32>
    %cst = arith.constant dense<0.000000e+00> : vector<8x16xf32>
    %2 = tpu.matmul %0, %1, %cst {dimension_numbers = #tpu.dot_dimension_numbers<[1], [0], [0], [1], [0, 0, 1, 1], [], []>} : vector<8x32xf32>, vector<32x16xf32>, vector<8x16xf32> -> vector<8x16xf32>
    %cst_3 = arith.constant dense<0.000000e+00> : vector<16xf32>
    %3 = vector.multi_reduction <add>, %2, %cst_3 [0] : vector<8x16xf32> to vector<16xf32>
    %4 = vector.shape_cast %3 : vector<16xf32> to vector<1x16xf32>
    %5 = arith.mulf %2, %2 : vector<8x16xf32>
    %cst_4 = arith.constant dense<0.000000e+00> : vector<16xf32>
    %6 = vector.multi_reduction <add>, %5, %cst_4 [0] : vector<8x16xf32> to vector<16xf32>
    %7 = vector.shape_cast %6 : vector<16xf32> to vector<1x16xf32>
    %8 = vector.extract_strided_slice %4 {offsets = [0, 0], sizes = [1, 8], strides = [1, 1]} : vector<1x16xf32> to vector<1x8xf32>
    %9 = vector.extract_strided_slice %7 {offsets = [0, 0], sizes = [1, 8], strides = [1, 1]} : vector<1x16xf32> to vector<1x8xf32>
    %10 = vector.extract_strided_slice %4 {offsets = [0, 8], sizes = [1, 8], strides = [1, 1]} : vector<1x16xf32> to vector<1x8xf32>
    %11 = arith.addf %8, %10 : vector<1x8xf32>
    %12 = vector.extract_strided_slice %7 {offsets = [0, 8], sizes = [1, 8], strides = [1, 1]} : vector<1x16xf32> to vector<1x8xf32>
    %13 = arith.addf %9, %12 : vector<1x8xf32>
    %cst_5 = arith.constant 6.250000e-02 : f32
    %14 = vector.broadcast %cst_5 : f32 to vector<1x8xf32>
    %15 = arith.mulf %11, %14 : vector<1x8xf32>
    %cst_6 = arith.constant 6.250000e-02 : f32
    %16 = vector.broadcast %cst_6 : f32 to vector<1x8xf32>
    %17 = arith.mulf %13, %16 : vector<1x8xf32>
    %18 = arith.mulf %15, %15 : vector<1x8xf32>
    %19 = arith.subf %17, %18 : vector<1x8xf32>
    %cst_7 = arith.constant 0.000000e+00 : f32
    %20 = vector.broadcast %cst_7 : f32 to vector<1x8xf32>
    %21 = arith.maximumf %19, %20 : vector<1x8xf32>
    %cst_8 = arith.constant 9.99999974E-6 : f32
    %22 = vector.broadcast %cst_8 : f32 to vector<1x8xf32>
    %23 = arith.addf %21, %22 : vector<1x8xf32>
    %24 = math.rsqrt %23 : vector<1x8xf32>
    %c0_9 = arith.constant 0 : index
    %c0_10 = arith.constant 0 : index
    %25 = vector.load %arg2[%c0_9, %c0_10] : memref<2x8xf32, #tpu.memory_space<vmem>>, vector<1x8xf32>
    %c1 = arith.constant 1 : index
    %c0_11 = arith.constant 0 : index
    %26 = vector.load %arg2[%c1, %c0_11] : memref<2x8xf32, #tpu.memory_space<vmem>>, vector<1x8xf32>
    %27 = arith.mulf %24, %25 : vector<1x8xf32>
    %28 = arith.mulf %15, %27 : vector<1x8xf32>
    %29 = arith.subf %26, %28 : vector<1x8xf32>
    %30 = vector.extract_strided_slice %2 {offsets = [0, 0], sizes = [8, 8], strides = [1, 1]} : vector<8x16xf32> to vector<8x8xf32>
    %31 = vector.broadcast %27 : vector<1x8xf32> to vector<8x8xf32>
    %32 = arith.mulf %30, %31 : vector<8x8xf32>
    %33 = vector.broadcast %29 : vector<1x8xf32> to vector<8x8xf32>
    %34 = arith.addf %32, %33 : vector<8x8xf32>
    %c0_12 = arith.constant 0 : index
    %c0_13 = arith.constant 0 : index
    %35 = vector.load %arg3[%c0_12, %c0_13] : memref<8x16xf32, #tpu.memory_space<vmem>>, vector<8x8xf32>
    tpu.vector_store %arg3[%c0_12, %c0_13], %34 {strides = array<i32>} : memref<8x16xf32, #tpu.memory_space<vmem>>, vector<8x8xf32>,
    %36 = vector.extract_strided_slice %2 {offsets = [0, 8], sizes = [8, 8], strides = [1, 1]} : vector<8x16xf32> to vector<8x8xf32>
    %37 = vector.broadcast %27 : vector<1x8xf32> to vector<8x8xf32>
    %38 = arith.mulf %36, %37 : vector<8x8xf32>
    %39 = vector.broadcast %29 : vector<1x8xf32> to vector<8x8xf32>
    %40 = arith.addf %38, %39 : vector<8x8xf32>
    %c0_14 = arith.constant 0 : index
    %c8 = arith.constant 8 : index
    %41 = vector.load %arg3[%c0_14, %c8] : memref<8x16xf32, #tpu.memory_space<vmem>>, vector<8x8xf32>
    tpu.vector_store %arg3[%c0_14, %c8], %40 {strides = array<i32>} : memref<8x16xf32, #tpu.memory_space<vmem>>, vector<8x8xf32>,
    return
  }
}

</mosaic_0001>

<llo_original>
// kernel: tpu_custom_call.1
$region0: #{tpu_custom_call.1}
  #allocation0 [shape = 'u32[]', space=smem, size = 0x4, offset = 0x4, fixed_abs, tag = 'smem constant byte address 0x4 - core index']
  #allocation1 [shape = 'u32[144,128]{1,0:T(1,128)}', space=vmem, size = 0x12000, scoped, tag = 'internal scratch']
  %s0 = inlined_call_operand.vmem [shape: f32[32,16], index: 0, kind: input, shape index: {}]
  %s1 = inlined_call_operand.vmem [shape: f32[8,32], index: 1, kind: input, shape index: {}]
  %s2 = inlined_call_operand.vmem [shape: f32[2,8], index: 2, kind: input, shape index: {}]
  %s3 = inlined_call_operand.hbm [shape: f32[8,16], index: 3, kind: output, shape index: {}]
  %s4 = sld [smem:[#allocation0]]
  $region22: #{tpu_custom_call.1} parent=0
    _
  %s6 = ssub.s32 1, %s4
  %s7 = scalar_select 0, %s6, %s4
  $region1: #{tpu_custom_call.1} parent=0
    #allocation2 [shape = 'u8[4096]{0}', space=vmem, size = 0x1000, scoped, tag = 'output window, operand 0, single buffered']
    #allocation3 [shape = 's32[1]{0}', space=sflag, size = 0x4, scoped, tag = 'scoped memory for tpu_custom_call.1']
    %8 = vsyncpa [#allocation3], 0
    // Predicated region
    $region2: #{tpu_custom_call.1} parent=1 // pred_check
      _
    $region3: #{tpu_custom_call.1} parent=1 // pred_check_branch
      %10 = sbr.rel (0) target = $region5
    $region4: #{tpu_custom_call.1} parent=1 // pred_region
      _
    $region5: #{tpu_custom_call.1} parent=1 // pred_fallthru
      _
    // Predicated region
    $region6: #{tpu_custom_call.1} parent=1 // pred_check
      _
    $region7: #{tpu_custom_call.1} parent=1 // pred_check_branch
      %12 = sbr.rel (0) target = $region9
    $region8: #{tpu_custom_call.1} parent=1 // pred_region
      _
    $region9: #{tpu_custom_call.1} parent=1 // pred_fallthru
      _
    // Predicated region
    $region10: #{tpu_custom_call.1} parent=1 // pred_check
      _
    $region11: #{tpu_custom_call.1} parent=1 // pred_check_branch
      %14 = sbr.rel (0) target = $region13
    $region12: #{tpu_custom_call.1} parent=1 // pred_region
      _
    $region13: #{tpu_custom_call.1} parent=1 // pred_fallthru
      _
    %v15 = vld [vmem:[%s1] sm:$0xff]
    %v16 = vld [vmem:[%s0] sm:$0xff]
    %v17 = vld [vmem:[%s0 + $0x8] sm:$0xff]
    %v18 = vld [vmem:[%s0 + $0x10] sm:$0xff]
    %v19 = vld [vmem:[%s0 + $0x18] sm:$0xff]
    %vm20 = vcmask 261120
    %v22 = vsel %vm20, %v15, 0
    %24 = vmatprep.subr.mxu0 0.0
    %25 = vmatpush1.msra.mxu0 %v16
    %26 = vmatprep.subr.mxu0 0.0
    %27 = vmatpush1.msra.mxu0 %v17
    %28 = vmatprep.subr.mxu0 0.0
    %29 = vmatpush1.msra.mxu0 %v18
    %30 = vmatprep.subr.mxu0 0.0
    %31 = vmatpush1.msra.mxu0 %v19
    %32 = vmatprep.subr.mxu0 0.0
    %33 = vmatpush1.msra.mxu0 0.0
    %34 = vmatprep.subr.mxu0 0.0
    %35 = vmatpush1.msra.mxu0 0.0
    %36 = vmatprep.subr.mxu0 0.0
    %37 = vmatpush1.msra.mxu0 0.0
    %38 = vmatprep.subr.mxu0 0.0
    %39 = vmatpush1.msra.mxu0 0.0
    %40 = vmatprep.subr.mxu0 0.0
    %41 = vmatpush1.msra.mxu0 0.0
    %42 = vmatprep.subr.mxu0 0.0
    %43 = vmatpush1.msra.mxu0 0.0
    %44 = vmatprep.subr.mxu0 0.0
    %45 = vmatpush1.msra.mxu0 0.0
    %46 = vmatprep.subr.mxu0 0.0
    %47 = vmatpush1.msra.mxu0 0.0
    %48 = vmatprep.subr.mxu0 0.0
    %49 = vmatpush1.msra.mxu0 0.0
    %50 = vmatprep.subr.mxu0 0.0
    %51 = vmatpush1.msra.mxu0 0.0
    %52 = vmatprep.subr.mxu0 0.0
    %53 = vmatpush1.msra.mxu0 0.0
    %54 = vmatprep.subr.mxu0 0.0
    %55 = vmatpush1.msra.mxu0 0.0
    %56 = vmatprep.subr.mxu0 0.0
    %57 = vmatpush1.msra.mxu0 0.0
    %58 = vmatprep.subr.mxu0 0.0
    %59 = vmatpush1.msra.mxu0 0.0
    %60 = vmatprep.subr.mxu0 0.0
    %61 = vmatpush1.msra.mxu0 0.0
    %62 = vmatprep.subr.mxu0 0.0
    %63 = vmatpush1.msra.mxu0 0.0
    %64 = vmatprep.subr.mxu0 0.0
    %65 = vmatpush1.msra.mxu0 0.0
    %66 = vmatprep.subr.mxu0 0.0
    %67 = vmatpush1.msra.mxu0 0.0
    %68 = vmatprep.subr.mxu0 0.0
    %69 = vmatpush1.msra.mxu0 0.0
    %70 = vmatprep.subr.mxu0 0.0
    %71 = vmatpush1.msra.mxu0 0.0
    %72 = vmatprep.subr.mxu0 0.0
    %73 = vmatpush1.msra.mxu0 0.0
    %74 = vmatprep.subr.mxu0 0.0
    %75 = vmatpush1.msra.mxu0 0.0
    %76 = vmatprep.subr.mxu0 0.0
    %77 = vmatpush1.msra.mxu0 0.0
    %78 = vmatprep.subr.mxu0 0.0
    %79 = vmatpush1.msra.mxu0 0.0
    %80 = vmatprep.subr.mxu0 0.0
    %81 = vmatpush1.msra.mxu0 0.0
    %82 = vmatprep.subr.mxu0 0.0
    %83 = vmatpush1.msra.mxu0 0.0
    %84 = vmatprep.subr.mxu0 0.0
    %85 = vmatpush1.msra.mxu0 0.0
    %86 = vmatprep.subr.mxu0 0.0
    %87 = vmatpush1.msra.mxu0 0.0
    %88 = vmatprep.mubr.f32.mxu0 0.0
    %89 = vmatmul.mubr.f32.gmra.mrb[0].mxu0 %v22
    %v90 = vpop.f32.mrb[0].mxu0
    %v91 = vadd.f32 0.0, %v90
    %v92 = vpop.f32.mrb[0].mxu0
    %93 = vdwg.mxu0
    %vm94 = vcmask 130048
    %v95 = vsel %vm94, %v91, 0.0
    %v96 = vrot.slane %v95, 4
    %v97 = vadd.f32 %v95, %v96
    %v98 = vrot.slane %v97, 2
    %v99 = vadd.f32 %v97, %v98
    %v100 = vrot.slane %v99, 1
    %v101 = vadd.f32 %v99, %v100
    %v102 = vmul.f32 %v91, %v91
    %v103 = vsel %vm94, %v102, 0.0
    %v104 = vrot.slane %v103, 4
    %v105 = vadd.f32 %v103, %v104
    %v106 = vrot.slane %v105, 2
    %v107 = vadd.f32 %v105, %v106
    %v108 = vrot.slane %v107, 1
    %v109 = vadd.f32 %v107, %v108
    %111 = vrot.lane.b32.xlu0 %v101, 120
    %v112 = vpop.permute.xlu0 %111
    %v114 = vadd.f32 %v101, %v112
    %116 = vrot.lane.b32.xlu0 %v109, 120
    %v117 = vpop.permute.xlu0 %116
    %v119 = vadd.f32 %v109, %v117
    %v120 = vmul.f32 %v114, 0.0625
    %v121 = vmul.f32 %v119, 0.0625
    %v122 = vmul.f32 %v120, %v120
    %v123 = vsub.f32 %v121, %v122
    %v124 = vmax.f32 %v123, 0.0
    %v125 = vadd.f32 %v124, 1e-05
    %v126 = vrsqrt.pop %v125
    %v127 = vld [vmem:[%s2] sm:$0x1]
    %v128 = vld [vmem:[%s2 + $0x1] sm:$0x1]
    %v129 = vmul.f32 %v126, %v127
    %v130 = vmul.f32 %v120, %v129
    %v131 = vsub.f32 %v128, %v130
    %v132 = vlaneseq
    %v133 = vshrl.u32 %v132, 7
    %v134 = vsub.s32 0, %v133
    %v135 = vrot.slane %v129, %v134
    %v136 = vmul.f32 %v91, %v135
    %v137 = vlaneseq
    %v138 = vshrl.u32 %v137, 7
    %v139 = vsub.s32 0, %v138
    %v140 = vrot.slane %v131, %v139
    %v141 = vadd.f32 %v136, %v140
    %vm142 = vcmask 64512
    %143 = vst.msk [vmem:[#allocation2] sm:$0xff] %vm142, %v141
    %145 = vrot.lane.b32.xlu0 %v135, 8
    %v146 = vpop.permute.xlu0 %145
    %v148 = vmul.f32 %v91, %v146
    %150 = vrot.lane.b32.xlu0 %v140, 8
    %v151 = vpop.permute.xlu0 %150
    %v153 = vadd.f32 %v148, %v151
    %vm154 = vcmask 130112
    %155 = vst.msk [vmem:[#allocation2] sm:$0xff] %vm154, %v153
    // Predicated region
    $region14: #{tpu_custom_call.1} parent=1 // pred_check
      _
    $region15: #{tpu_custom_call.1} parent=1 // pred_check_branch
      %157 = sbr.rel (0) target = $region17
    $region16: #{tpu_custom_call.1} parent=1 // pred_region
      %s159 = ssub.s32 128, 128
      %160 = vsyncadd [#allocation3], %s159
      %s162 = sshll.u32 [#allocation2], 4
      %s163 = int_to_ptr.vmem [resolvable:$true] %s162
      %165 = dma.vmem_to_hbm [thread:$0]  %s163, 128, %s3, [#allocation3]
    $region17: #{tpu_custom_call.1} parent=1 // pred_fallthru
      _
    // Predicated region
    $region18: #{tpu_custom_call.1} parent=1 // pred_check
      _
    $region19: #{tpu_custom_call.1} parent=1 // pred_check_branch
      %167 = sbr.rel (0) target = $region21
    $region20: #{tpu_custom_call.1} parent=1 // pred_region
      %168 = dma.done [#allocation3], 128
    $region21: #{tpu_custom_call.1} parent=1 // pred_fallthru
      _
    %169 = vsyncpa [#allocation3], 1

</llo_original>
